<compile_context>
chip_gen: v7x
topology: tpu7x:2x2x1
jax: 0.10.0
libtpu: 0.0.40
codegen_flags: <defaults>
</compile_context>

<pallas_src>
import functools

import jax
import jax.numpy as jnp
from jax import lax
from jax.experimental import pallas as pl
from jax.experimental.pallas import tpu as pltpu

HIDDEN_DIM = 32
INPUT_SIZE = 1
OUTPUT_SIZE = 1
N_LAYERS = 1

_LANE = 128
_SUBLANE = 8
_MAX_T_CHUNK = 1024
# Budget for ONE pipeline buffer of the streamed x chunk.  In VMEM a chunk block
# (T_chunk, BB, G*I) is lane-padded to (T_chunk, BB, 128) f32, i.e.
# T_chunk * BB * 128 * 4 bytes.  4 MiB/buffer -> <= 8 MiB double-buffered, safely
# inside the scoped-VMEM default on v5e/v6e/v7x.
_X_CHUNK_VMEM_BYTES = 4 * 1024 * 1024


def _cdiv(a, b):
    return (a + b - 1) // b


def _round_up(x, m):
    return (x + m - 1) // m * m


def _rnn_chunk_kernel(h0_ref, x_ref, wsel_ref, bias_ref, whh_ref, fcw_ref, fcb_ref,
                      out_ref, hn_ref, h_scr, *, t_chunk, t_rem, unroll):
    """Grid = (batch_blocks, time_chunks); time axis serial ("arbitrary").

    h0_ref : (BB, G*H)          initial hidden, lane-packed (G batch groups)
    x_ref  : (Tc, BB, G*I)      raw input chunk, lane-packed
    wsel_ref: (G*I, G*H)        block-diagonal W_ih^T
    bias_ref: (1, G*H)          b_ih + b_hh, replicated per group
    whh_ref: (G*H, G*H)         block-diagonal W_hh^T
    fcw_ref: (G*H, O_pad)       block-diagonal fc weight^T (lane-padded)
    fcb_ref: (1, O_pad)         fc bias, replicated per group (lane-padded)
    out_ref: (BB, O_pad)        fc(h_T)
    hn_ref : (BB, G*H)          final hidden state
    h_scr  : (BB, G*H)          hidden-state carry, persists across time chunks
    """
    tc = pl.program_id(1)
    last = pl.num_programs(1) - 1

    @pl.when(tc == 0)
    def _():
        h_scr[...] = h0_ref[...]

    whh = whh_ref[...]
    bias = bias_ref[...]
    gi = wsel_ref.shape[0]

    def step(t, h):
        x_t = x_ref[t]                                    # (BB, G*I)
        if gi == 1:
            # INPUT_SIZE==1, G==1: pure VPU broadcast mul+add (no MXU needed).
            u_t = x_t * wsel_ref[...] + bias
        else:
            u_t = jnp.dot(x_t, wsel_ref[...],
                          preferred_element_type=jnp.float32) + bias
        return jnp.tanh(u_t + jnp.dot(h, whh, preferred_element_type=jnp.float32))

    # Static trip counts so fori_loop can unroll.  The (possibly short) tail chunk
    # runs exactly its real length -> no per-step ragged mask, no wasted steps.
    if t_rem == 0:
        h_scr[...] = lax.fori_loop(0, t_chunk, step, h_scr[...],
                                   unroll=min(unroll, t_chunk))
    else:
        @pl.when(tc != last)
        def _():
            h_scr[...] = lax.fori_loop(0, t_chunk, step, h_scr[...],
                                       unroll=min(unroll, t_chunk))

        @pl.when(tc == last)
        def _():
            h_scr[...] = lax.fori_loop(0, t_rem, step, h_scr[...],
                                       unroll=min(unroll, t_rem))

    @pl.when(tc == last)
    def _():
        h = h_scr[...]
        hn_ref[...] = h
        out_ref[...] = (jnp.dot(h, fcw_ref[...], preferred_element_type=jnp.float32)
                        + fcb_ref[...])


def rnn_forward(x, hidden, params, *, max_t_chunk=_MAX_T_CHUNK):
    """x: (B, T, I) float32 (batch_first); hidden: (N_LAYERS, B, H).

    Returns (out, hidden_out): out (B, O), hidden_out (N_LAYERS, B, H).
    """
    B, T, I = x.shape
    H, O = HIDDEN_DIM, OUTPUT_SIZE

    # ---- batch packing geometry --------------------------------------------
    # G lane groups of width H packed into the 128-lane axis (power of two so the
    # lane dim stays 32/64/128); BB sublane rows per batch block; nb batch blocks.
    G = int(min(_LANE // H, pl.next_power_of_2(_cdiv(B, _SUBLANE))))
    rows = _round_up(_cdiv(B, G), _SUBLANE)
    if rows >= 2 * _SUBLANE:
        nb = 2                      # >=2 "parallel" blocks so v7x megacore has work per core
        BB = _round_up(_cdiv(rows, nb), _SUBLANE)
    else:
        nb, BB = 1, rows
    B_pad = nb * G * BB
    GI, GH = G * I, G * H

    # ---- time chunking sized from real lane-padded VMEM usage ---------------
    row_bytes = BB * _round_up(GI, _LANE) * 4       # one timestep of x in VMEM
    T_chunk = int(max(1, min(max_t_chunk, _X_CHUNK_VMEM_BYTES // row_bytes, T)))
    T_pad = _round_up(T, T_chunk)
    nt = T_pad // T_chunk
    t_rem = T % T_chunk                             # 0 when T divides evenly

    f32 = jnp.float32
    # ---- operand packing -----------------------------------------------------
    # batch index i  <->  (block b, lane-group g, sublane row r):  i = (b*G + g)*BB + r
    xp = jnp.pad(x.astype(f32), ((0, B_pad - B), (0, T_pad - T), (0, 0)))
    x_pk = (xp.reshape(nb, G, BB, T_pad, I)
              .transpose(0, 3, 2, 1, 4)
              .reshape(nb, T_pad, BB, GI))          # contiguous per (block, chunk)

    h0 = jnp.pad(hidden[0].astype(f32), ((0, B_pad - B), (0, 0)))
    h0_pk = h0.reshape(nb, G, BB, H).transpose(0, 2, 1, 3).reshape(nb * BB, GH)

    eye = jnp.eye(G, dtype=f32)
    w_sel = jnp.kron(eye, params["w_ih"].T.astype(f32))       # (GI, GH) block-diag W_ih^T
    whh_bd = jnp.kron(eye, params["w_hh"].T.astype(f32))      # (GH, GH) block-diag W_hh^T
    bias = jnp.tile((params["b_ih"] + params["b_hh"]).astype(f32), G).reshape(1, GH)

    O_pad = _round_up(max(G * O, _LANE), _LANE)
    fcw_bd = jnp.pad(jnp.kron(eye, params["fc_w"].T.astype(f32)),
                     ((0, 0), (0, O_pad - G * O)))             # (GH, O_pad)
    fcb = jnp.pad(jnp.tile(params["fc_b"].astype(f32), G).reshape(1, G * O),
                  ((0, 0), (0, O_pad - G * O)))                # (1, O_pad)

    kernel = functools.partial(_rnn_chunk_kernel, t_chunk=T_chunk, t_rem=t_rem,
                               unroll=16)

    out_p, hn_p = pl.pallas_call(
        kernel,
        out_shape=(jax.ShapeDtypeStruct((nb * BB, O_pad), f32),
                   jax.ShapeDtypeStruct((nb * BB, GH), f32)),
        grid=(nb, nt),
        in_specs=[
            pl.BlockSpec((BB, GH), lambda b, t: (b, 0)),                    # h0
            pl.BlockSpec((None, T_chunk, BB, GI), lambda b, t: (b, t, 0, 0)),  # x chunk
            pl.BlockSpec((GI, GH), lambda b, t: (0, 0)),                    # W_ih^T (bd)
            pl.BlockSpec((1, GH), lambda b, t: (0, 0)),                     # b_ih+b_hh
            pl.BlockSpec((GH, GH), lambda b, t: (0, 0)),                    # W_hh^T (bd)
            pl.BlockSpec((GH, O_pad), lambda b, t: (0, 0)),                 # fc_w^T (bd)
            pl.BlockSpec((1, O_pad), lambda b, t: (0, 0)),                  # fc_b
        ],
        out_specs=(
            pl.BlockSpec((BB, O_pad), lambda b, t: (b, 0)),                 # out
            pl.BlockSpec((BB, GH), lambda b, t: (b, 0)),                    # h_n
        ),
        scratch_shapes=[pltpu.VMEM((BB, GH), jnp.float32)],
        compiler_params=pltpu.CompilerParams(
            dimension_semantics=("parallel", "arbitrary"),
            vmem_limit_bytes=32 * 1024 * 1024),
    )(h0_pk, x_pk, w_sel, bias, whh_bd, fcw_bd, fcb)

    # ---- de-interleave the lane-packed outputs -------------------------------
    out = (out_p.reshape(nb, BB, O_pad)[:, :, :G * O]
                .reshape(nb, BB, G, O)
                .transpose(0, 2, 1, 3)
                .reshape(B_pad, O))[:B]
    hn = (hn_p.reshape(nb, BB, G, H)
              .transpose(0, 2, 1, 3)
              .reshape(B_pad, H))[:B]
    return out, hn[None]


def init_params(key):
    """Deterministic init mimicking PyTorch's U(-1/sqrt(H), 1/sqrt(H))."""
    H, I, O = HIDDEN_DIM, INPUT_SIZE, OUTPUT_SIZE
    k = 1.0 / jnp.sqrt(jnp.float32(H))
    keys = jax.random.split(key, 6)
    u = lambda kk, shape: jax.random.uniform(kk, shape, jnp.float32, -k, k)
    return {
        "w_ih": u(keys[0], (H, I)),   # nn.RNN weight_ih_l0
        "w_hh": u(keys[1], (H, H)),   # nn.RNN weight_hh_l0
        "b_ih": u(keys[2], (H,)),     # nn.RNN bias_ih_l0
        "b_hh": u(keys[3], (H,)),     # nn.RNN bias_hh_l0
        "fc_w": u(keys[4], (O, H)),   # nn.Linear weight
        "fc_b": u(keys[5], (O,)),     # nn.Linear bias
    }


def rnn_forward_ref(x, hidden, params):
    """Pure-JAX reference with identical semantics (for verification)."""
    def step(h, x_t):
        h = jnp.tanh(x_t @ params["w_ih"].T + params["b_ih"]
                     + h @ params["w_hh"].T + params["b_hh"])
        return h, None

    h_T, _ = lax.scan(step, hidden[0], jnp.transpose(x, (1, 0, 2)))
    out = h_T @ params["fc_w"].T + params["fc_b"]     # fc of the last timestep
    return out, h_T[None]


def _check(B, T, key, max_t_chunk=_MAX_T_CHUNK):
    k_param, k_x, k_h = jax.random.split(key, 3)
    params = init_params(k_param)
    x = jax.random.normal(k_x, (B, T, INPUT_SIZE), jnp.float32)
    hidden = 0.1 * jax.random.normal(k_h, (N_LAYERS, B, HIDDEN_DIM), jnp.float32)

    out, h_n = rnn_forward(x, hidden, params, max_t_chunk=max_t_chunk)
    out, h_n = jax.block_until_ready((out, h_n))

    out_ref, h_ref = rnn_forward_ref(x, hidden, params)
    assert out.shape == (B, OUTPUT_SIZE)
    assert h_n.shape == (N_LAYERS, B, HIDDEN_DIM)
    assert jnp.allclose(out, out_ref, atol=1e-5), f"fc output mismatch (B={B}, T={T})"
    assert jnp.allclose(h_n, h_ref, atol=1e-5), f"hidden state mismatch (B={B}, T={T})"


if __name__ == "__main__":
    key = jax.random.PRNGKey(0)
    ks = jax.random.split(key, 4)

    # Small shape consistent with the module (batch=2, seq=8, input=1, hidden=32).
    _check(B=2, T=8, key=ks[0])
    # Module's training batch size: full 4-way lane packing (G=4), no padding.
    _check(B=32, T=24, key=ks[1])
    # Partially padded lane group + time chunking with a short tail chunk.
    _check(B=20, T=70, key=ks[2], max_t_chunk=32)
    # Two batch blocks (v7x megacore path) + multiple full chunks + tail.
    _check(B=64, T=130, key=ks[3], max_t_chunk=64)

    print("KERNEL_OK")
</pallas_src>

<mosaic_0001>
module attributes {stable_mosaic.version = 11 : i64} {
  func.func @_rnn_chunk_kernel(%arg0: i32, %arg1: i32, %arg2: memref<8x32xf32, #tpu.memory_space<vmem>>, %arg3: memref<1x8x8x1xf32, #tpu.memory_space<vmem>>, %arg4: memref<1x32xf32, #tpu.memory_space<vmem>>, %arg5: memref<1x32xf32, #tpu.memory_space<vmem>>, %arg6: memref<32x32xf32, #tpu.memory_space<vmem>>, %arg7: memref<32x128xf32, #tpu.memory_space<vmem>>, %arg8: memref<1x128xf32, #tpu.memory_space<vmem>>, %arg9: memref<8x128xf32, #tpu.memory_space<vmem>>, %arg10: memref<8x32xf32, #tpu.memory_space<vmem>>, %arg11: memref<8x32xf32, #tpu.memory_space<vmem>>) attributes {dimension_semantics = [#tpu.dimension_semantics<parallel>, #tpu.dimension_semantics<arbitrary>], iteration_bounds = array<i64: 1, 1>, scalar_prefetch = 0 : i64, scratch_operands = 1 : i64, tpu.core_type = #tpu.core_type<tc>, window_params = [{transform_indices = @transform_0, window_bounds = array<i64: 8, 32>}, {transform_indices = @transform_1, window_bounds = array<i64: 1, 8, 8, 1>}, {pipeline_mode = #tpu.pipeline_mode<synchronous>, transform_indices = @transform_2, window_bounds = array<i64: 1, 32>}, {pipeline_mode = #tpu.pipeline_mode<synchronous>, transform_indices = @transform_3, window_bounds = array<i64: 1, 32>}, {pipeline_mode = #tpu.pipeline_mode<synchronous>, transform_indices = @transform_4, window_bounds = array<i64: 32, 32>}, {pipeline_mode = #tpu.pipeline_mode<synchronous>, transform_indices = @transform_5, window_bounds = array<i64: 32, 128>}, {pipeline_mode = #tpu.pipeline_mode<synchronous>, transform_indices = @transform_6, window_bounds = array<i64: 1, 128>}, {transform_indices = @transform_7, window_bounds = array<i64: 8, 128>}, {transform_indices = @transform_8, window_bounds = array<i64: 8, 32>}]} {
    %c0_i32 = arith.constant 0 : i32
    %0 = arith.cmpi eq, %arg1, %c0_i32 : i32
    %1 = arith.extui %0 : i1 to i32
    %c0_i32_0 = arith.constant 0 : i32
    %2 = arith.cmpi ne, %1, %c0_i32_0 : i32
    scf.if %2 {
      %c0_58 = arith.constant 0 : index
      %c0_59 = arith.constant 0 : index
      %106 = vector.load %arg2[%c0_58, %c0_59] : memref<8x32xf32, #tpu.memory_space<vmem>>, vector<8x32xf32>
      %c0_60 = arith.constant 0 : index
      %c0_61 = arith.constant 0 : index
      %107 = vector.load %arg11[%c0_60, %c0_61] : memref<8x32xf32, #tpu.memory_space<vmem>>, vector<8x32xf32>
      tpu.vector_store %arg11[%c0_60, %c0_61], %106 {strides = array<i32>} : memref<8x32xf32, #tpu.memory_space<vmem>>, vector<8x32xf32>,
    } else {
    }
    %c0 = arith.constant 0 : index
    %c0_1 = arith.constant 0 : index
    %3 = vector.load %arg6[%c0, %c0_1] : memref<32x32xf32, #tpu.memory_space<vmem>>, vector<32x32xf32>
    %c0_2 = arith.constant 0 : index
    %c0_3 = arith.constant 0 : index
    %4 = vector.load %arg5[%c0_2, %c0_3] : memref<1x32xf32, #tpu.memory_space<vmem>>, vector<1x32xf32>
    %c0_4 = arith.constant 0 : index
    %c0_5 = arith.constant 0 : index
    %5 = vector.load %arg11[%c0_4, %c0_5] : memref<8x32xf32, #tpu.memory_space<vmem>>, vector<8x32xf32>
    %c0_i32_6 = arith.constant 0 : i32
    %c0_7 = arith.constant 0 : index
    %6 = arith.index_cast %c0_i32_6 : i32 to index
    %c0_8 = arith.constant 0 : index
    %c0_9 = arith.constant 0 : index
    %7 = vector.load %arg3[%c0_7, %6, %c0_8, %c0_9] : memref<1x8x8x1xf32, #tpu.memory_space<vmem>>, vector<1x1x8x1xf32>
    %8 = vector.shape_cast %7 : vector<1x1x8x1xf32> to vector<8x1xf32>
    %c0_10 = arith.constant 0 : index
    %c0_11 = arith.constant 0 : index
    %9 = vector.load %arg4[%c0_10, %c0_11] : memref<1x32xf32, #tpu.memory_space<vmem>>, vector<1x32xf32>
    %10 = vector.broadcast %8 : vector<8x1xf32> to vector<8x32xf32>
    %11 = vector.broadcast %9 : vector<1x32xf32> to vector<8x32xf32>
    %12 = arith.mulf %10, %11 : vector<8x32xf32>
    %13 = vector.broadcast %4 : vector<1x32xf32> to vector<8x32xf32>
    %14 = arith.addf %12, %13 : vector<8x32xf32>
    %cst = arith.constant dense<0.000000e+00> : vector<8x32xf32>
    %15 = tpu.matmul %5, %3, %cst {dimension_numbers = #tpu.dot_dimension_numbers<[1], [0], [0], [1], [0, 0, 1, 1], [], []>} : vector<8x32xf32>, vector<32x32xf32>, vector<8x32xf32> -> vector<8x32xf32>
    %16 = arith.addf %14, %15 : vector<8x32xf32>
    %17 = math.tanh %16 : vector<8x32xf32>
    %c1_i32 = arith.constant 1 : i32
    %c0_12 = arith.constant 0 : index
    %18 = arith.index_cast %c1_i32 : i32 to index
    %c0_13 = arith.constant 0 : index
    %c0_14 = arith.constant 0 : index
    %19 = vector.load %arg3[%c0_12, %18, %c0_13, %c0_14] : memref<1x8x8x1xf32, #tpu.memory_space<vmem>>, vector<1x1x8x1xf32>
    %20 = vector.shape_cast %19 : vector<1x1x8x1xf32> to vector<8x1xf32>
    %c0_15 = arith.constant 0 : index
    %c0_16 = arith.constant 0 : index
    %21 = vector.load %arg4[%c0_15, %c0_16] : memref<1x32xf32, #tpu.memory_space<vmem>>, vector<1x32xf32>
    %22 = vector.broadcast %20 : vector<8x1xf32> to vector<8x32xf32>
    %23 = vector.broadcast %21 : vector<1x32xf32> to vector<8x32xf32>
    %24 = arith.mulf %22, %23 : vector<8x32xf32>
    %25 = vector.broadcast %4 : vector<1x32xf32> to vector<8x32xf32>
    %26 = arith.addf %24, %25 : vector<8x32xf32>
    %cst_17 = arith.constant dense<0.000000e+00> : vector<8x32xf32>
    %27 = tpu.matmul %17, %3, %cst_17 {dimension_numbers = #tpu.dot_dimension_numbers<[1], [0], [0], [1], [0, 0, 1, 1], [], []>} : vector<8x32xf32>, vector<32x32xf32>, vector<8x32xf32> -> vector<8x32xf32>
    %28 = arith.addf %26, %27 : vector<8x32xf32>
    %29 = math.tanh %28 : vector<8x32xf32>
    %c2_i32 = arith.constant 2 : i32
    %c0_18 = arith.constant 0 : index
    %30 = arith.index_cast %c2_i32 : i32 to index
    %c0_19 = arith.constant 0 : index
    %c0_20 = arith.constant 0 : index
    %31 = vector.load %arg3[%c0_18, %30, %c0_19, %c0_20] : memref<1x8x8x1xf32, #tpu.memory_space<vmem>>, vector<1x1x8x1xf32>
    %32 = vector.shape_cast %31 : vector<1x1x8x1xf32> to vector<8x1xf32>
    %c0_21 = arith.constant 0 : index
    %c0_22 = arith.constant 0 : index
    %33 = vector.load %arg4[%c0_21, %c0_22] : memref<1x32xf32, #tpu.memory_space<vmem>>, vector<1x32xf32>
    %34 = vector.broadcast %32 : vector<8x1xf32> to vector<8x32xf32>
    %35 = vector.broadcast %33 : vector<1x32xf32> to vector<8x32xf32>
    %36 = arith.mulf %34, %35 : vector<8x32xf32>
    %37 = vector.broadcast %4 : vector<1x32xf32> to vector<8x32xf32>
    %38 = arith.addf %36, %37 : vector<8x32xf32>
    %cst_23 = arith.constant dense<0.000000e+00> : vector<8x32xf32>
    %39 = tpu.matmul %29, %3, %cst_23 {dimension_numbers = #tpu.dot_dimension_numbers<[1], [0], [0], [1], [0, 0, 1, 1], [], []>} : vector<8x32xf32>, vector<32x32xf32>, vector<8x32xf32> -> vector<8x32xf32>
    %40 = arith.addf %38, %39 : vector<8x32xf32>
    %41 = math.tanh %40 : vector<8x32xf32>
    %c3_i32 = arith.constant 3 : i32
    %c0_24 = arith.constant 0 : index
    %42 = arith.index_cast %c3_i32 : i32 to index
    %c0_25 = arith.constant 0 : index
    %c0_26 = arith.constant 0 : index
    %43 = vector.load %arg3[%c0_24, %42, %c0_25, %c0_26] : memref<1x8x8x1xf32, #tpu.memory_space<vmem>>, vector<1x1x8x1xf32>
    %44 = vector.shape_cast %43 : vector<1x1x8x1xf32> to vector<8x1xf32>
    %c0_27 = arith.constant 0 : index
    %c0_28 = arith.constant 0 : index
    %45 = vector.load %arg4[%c0_27, %c0_28] : memref<1x32xf32, #tpu.memory_space<vmem>>, vector<1x32xf32>
    %46 = vector.broadcast %44 : vector<8x1xf32> to vector<8x32xf32>
    %47 = vector.broadcast %45 : vector<1x32xf32> to vector<8x32xf32>
    %48 = arith.mulf %46, %47 : vector<8x32xf32>
    %49 = vector.broadcast %4 : vector<1x32xf32> to vector<8x32xf32>
    %50 = arith.addf %48, %49 : vector<8x32xf32>
    %cst_29 = arith.constant dense<0.000000e+00> : vector<8x32xf32>
    %51 = tpu.matmul %41, %3, %cst_29 {dimension_numbers = #tpu.dot_dimension_numbers<[1], [0], [0], [1], [0, 0, 1, 1], [], []>} : vector<8x32xf32>, vector<32x32xf32>, vector<8x32xf32> -> vector<8x32xf32>
    %52 = arith.addf %50, %51 : vector<8x32xf32>
    %53 = math.tanh %52 : vector<8x32xf32>
    %c4_i32 = arith.constant 4 : i32
    %c0_30 = arith.constant 0 : index
    %54 = arith.index_cast %c4_i32 : i32 to index
    %c0_31 = arith.constant 0 : index
    %c0_32 = arith.constant 0 : index
    %55 = vector.load %arg3[%c0_30, %54, %c0_31, %c0_32] : memref<1x8x8x1xf32, #tpu.memory_space<vmem>>, vector<1x1x8x1xf32>
    %56 = vector.shape_cast %55 : vector<1x1x8x1xf32> to vector<8x1xf32>
    %c0_33 = arith.constant 0 : index
    %c0_34 = arith.constant 0 : index
    %57 = vector.load %arg4[%c0_33, %c0_34] : memref<1x32xf32, #tpu.memory_space<vmem>>, vector<1x32xf32>
    %58 = vector.broadcast %56 : vector<8x1xf32> to vector<8x32xf32>
    %59 = vector.broadcast %57 : vector<1x32xf32> to vector<8x32xf32>
    %60 = arith.mulf %58, %59 : vector<8x32xf32>
    %61 = vector.broadcast %4 : vector<1x32xf32> to vector<8x32xf32>
    %62 = arith.addf %60, %61 : vector<8x32xf32>
    %cst_35 = arith.constant dense<0.000000e+00> : vector<8x32xf32>
    %63 = tpu.matmul %53, %3, %cst_35 {dimension_numbers = #tpu.dot_dimension_numbers<[1], [0], [0], [1], [0, 0, 1, 1], [], []>} : vector<8x32xf32>, vector<32x32xf32>, vector<8x32xf32> -> vector<8x32xf32>
    %64 = arith.addf %62, %63 : vector<8x32xf32>
    %65 = math.tanh %64 : vector<8x32xf32>
    %c5_i32 = arith.constant 5 : i32
    %c0_36 = arith.constant 0 : index
    %66 = arith.index_cast %c5_i32 : i32 to index
    %c0_37 = arith.constant 0 : index
    %c0_38 = arith.constant 0 : index
    %67 = vector.load %arg3[%c0_36, %66, %c0_37, %c0_38] : memref<1x8x8x1xf32, #tpu.memory_space<vmem>>, vector<1x1x8x1xf32>
    %68 = vector.shape_cast %67 : vector<1x1x8x1xf32> to vector<8x1xf32>
    %c0_39 = arith.constant 0 : index
    %c0_40 = arith.constant 0 : index
    %69 = vector.load %arg4[%c0_39, %c0_40] : memref<1x32xf32, #tpu.memory_space<vmem>>, vector<1x32xf32>
    %70 = vector.broadcast %68 : vector<8x1xf32> to vector<8x32xf32>
    %71 = vector.broadcast %69 : vector<1x32xf32> to vector<8x32xf32>
    %72 = arith.mulf %70, %71 : vector<8x32xf32>
    %73 = vector.broadcast %4 : vector<1x32xf32> to vector<8x32xf32>
    %74 = arith.addf %72, %73 : vector<8x32xf32>
    %cst_41 = arith.constant dense<0.000000e+00> : vector<8x32xf32>
    %75 = tpu.matmul %65, %3, %cst_41 {dimension_numbers = #tpu.dot_dimension_numbers<[1], [0], [0], [1], [0, 0, 1, 1], [], []>} : vector<8x32xf32>, vector<32x32xf32>, vector<8x32xf32> -> vector<8x32xf32>
    %76 = arith.addf %74, %75 : vector<8x32xf32>
    %77 = math.tanh %76 : vector<8x32xf32>
    %c6_i32 = arith.constant 6 : i32
    %c0_42 = arith.constant 0 : index
    %78 = arith.index_cast %c6_i32 : i32 to index
    %c0_43 = arith.constant 0 : index
    %c0_44 = arith.constant 0 : index
    %79 = vector.load %arg3[%c0_42, %78, %c0_43, %c0_44] : memref<1x8x8x1xf32, #tpu.memory_space<vmem>>, vector<1x1x8x1xf32>
    %80 = vector.shape_cast %79 : vector<1x1x8x1xf32> to vector<8x1xf32>
    %c0_45 = arith.constant 0 : index
    %c0_46 = arith.constant 0 : index
    %81 = vector.load %arg4[%c0_45, %c0_46] : memref<1x32xf32, #tpu.memory_space<vmem>>, vector<1x32xf32>
    %82 = vector.broadcast %80 : vector<8x1xf32> to vector<8x32xf32>
    %83 = vector.broadcast %81 : vector<1x32xf32> to vector<8x32xf32>
    %84 = arith.mulf %82, %83 : vector<8x32xf32>
    %85 = vector.broadcast %4 : vector<1x32xf32> to vector<8x32xf32>
    %86 = arith.addf %84, %85 : vector<8x32xf32>
    %cst_47 = arith.constant dense<0.000000e+00> : vector<8x32xf32>
    %87 = tpu.matmul %77, %3, %cst_47 {dimension_numbers = #tpu.dot_dimension_numbers<[1], [0], [0], [1], [0, 0, 1, 1], [], []>} : vector<8x32xf32>, vector<32x32xf32>, vector<8x32xf32> -> vector<8x32xf32>
    %88 = arith.addf %86, %87 : vector<8x32xf32>
    %89 = math.tanh %88 : vector<8x32xf32>
    %c7_i32 = arith.constant 7 : i32
    %c0_48 = arith.constant 0 : index
    %90 = arith.index_cast %c7_i32 : i32 to index
    %c0_49 = arith.constant 0 : index
    %c0_50 = arith.constant 0 : index
    %91 = vector.load %arg3[%c0_48, %90, %c0_49, %c0_50] : memref<1x8x8x1xf32, #tpu.memory_space<vmem>>, vector<1x1x8x1xf32>
    %92 = vector.shape_cast %91 : vector<1x1x8x1xf32> to vector<8x1xf32>
    %c0_51 = arith.constant 0 : index
    %c0_52 = arith.constant 0 : index
    %93 = vector.load %arg4[%c0_51, %c0_52] : memref<1x32xf32, #tpu.memory_space<vmem>>, vector<1x32xf32>
    %94 = vector.broadcast %92 : vector<8x1xf32> to vector<8x32xf32>
    %95 = vector.broadcast %93 : vector<1x32xf32> to vector<8x32xf32>
    %96 = arith.mulf %94, %95 : vector<8x32xf32>
    %97 = vector.broadcast %4 : vector<1x32xf32> to vector<8x32xf32>
    %98 = arith.addf %96, %97 : vector<8x32xf32>
    %cst_53 = arith.constant dense<0.000000e+00> : vector<8x32xf32>
    %99 = tpu.matmul %89, %3, %cst_53 {dimension_numbers = #tpu.dot_dimension_numbers<[1], [0], [0], [1], [0, 0, 1, 1], [], []>} : vector<8x32xf32>, vector<32x32xf32>, vector<8x32xf32> -> vector<8x32xf32>
    %100 = arith.addf %98, %99 : vector<8x32xf32>
    %101 = math.tanh %100 : vector<8x32xf32>
    %c8_i32 = arith.constant 8 : i32
    %c0_54 = arith.constant 0 : index
    %c0_55 = arith.constant 0 : index
    %102 = vector.load %arg11[%c0_54, %c0_55] : memref<8x32xf32, #tpu.memory_space<vmem>>, vector<8x32xf32>
    tpu.vector_store %arg11[%c0_54, %c0_55], %101 {strides = array<i32>} : memref<8x32xf32, #tpu.memory_space<vmem>>, vector<8x32xf32>,
    %c0_i32_56 = arith.constant 0 : i32
    %103 = arith.cmpi eq, %arg1, %c0_i32_56 : i32
    %104 = arith.extui %103 : i1 to i32
    %c0_i32_57 = arith.constant 0 : i32
    %105 = arith.cmpi ne, %104, %c0_i32_57 : i32
    scf.if %105 {
      %c0_58 = arith.constant 0 : index
      %c0_59 = arith.constant 0 : index
      %106 = vector.load %arg11[%c0_58, %c0_59] : memref<8x32xf32, #tpu.memory_space<vmem>>, vector<8x32xf32>
      %c0_60 = arith.constant 0 : index
      %c0_61 = arith.constant 0 : index
      %107 = vector.load %arg10[%c0_60, %c0_61] : memref<8x32xf32, #tpu.memory_space<vmem>>, vector<8x32xf32>
      tpu.vector_store %arg10[%c0_60, %c0_61], %106 {strides = array<i32>} : memref<8x32xf32, #tpu.memory_space<vmem>>, vector<8x32xf32>,
      %c0_62 = arith.constant 0 : index
      %c0_63 = arith.constant 0 : index
      %108 = vector.load %arg7[%c0_62, %c0_63] : memref<32x128xf32, #tpu.memory_space<vmem>>, vector<32x128xf32>
      %cst_64 = arith.constant dense<0.000000e+00> : vector<8x128xf32>
      %109 = tpu.matmul %106, %108, %cst_64 {dimension_numbers = #tpu.dot_dimension_numbers<[1], [0], [0], [1], [0, 0, 1, 1], [], []>} : vector<8x32xf32>, vector<32x128xf32>, vector<8x128xf32> -> vector<8x128xf32>
      %c0_65 = arith.constant 0 : index
      %c0_66 = arith.constant 0 : index
      %110 = vector.load %arg8[%c0_65, %c0_66] : memref<1x128xf32, #tpu.memory_space<vmem>>, vector<1x128xf32>
      %111 = vector.broadcast %110 : vector<1x128xf32> to vector<8x128xf32>
      %112 = arith.addf %109, %111 : vector<8x128xf32>
      %c0_67 = arith.constant 0 : index
      %c0_68 = arith.constant 0 : index
      %113 = vector.load %arg9[%c0_67, %c0_68] : memref<8x128xf32, #tpu.memory_space<vmem>>, vector<8x128xf32>
      tpu.vector_store %arg9[%c0_67, %c0_68], %112 {strides = array<i32>} : memref<8x128xf32, #tpu.memory_space<vmem>>, vector<8x128xf32>,
    } else {
    }
    return
  }
  func.func @transform_0(%arg0: i32, %arg1: i32) -> (i32, i32) {
    %c0_i32 = arith.constant 0 : i32
    %c0_i32_0 = arith.constant 0 : i32
    return %arg0, %c0_i32 : i32, i32
  }
  func.func @transform_1(%arg0: i32, %arg1: i32) -> (i32, i32, i32, i32) {
    %c0_i32 = arith.constant 0 : i32
    %c0_i32_0 = arith.constant 0 : i32
    %c0_i32_1 = arith.constant 0 : i32
    return %arg0, %arg1, %c0_i32, %c0_i32_0 : i32, i32, i32, i32
  }
  func.func @transform_2(%arg0: i32, %arg1: i32) -> (i32, i32) {
    %c0_i32 = arith.constant 0 : i32
    %c0_i32_0 = arith.constant 0 : i32
    %c0_i32_1 = arith.constant 0 : i32
    return %c0_i32, %c0_i32_0 : i32, i32
  }
  func.func @transform_3(%arg0: i32, %arg1: i32) -> (i32, i32) {
    %c0_i32 = arith.constant 0 : i32
    %c0_i32_0 = arith.constant 0 : i32
    %c0_i32_1 = arith.constant 0 : i32
    return %c0_i32, %c0_i32_0 : i32, i32
  }
  func.func @transform_4(%arg0: i32, %arg1: i32) -> (i32, i32) {
    %c0_i32 = arith.constant 0 : i32
    %c0_i32_0 = arith.constant 0 : i32
    %c0_i32_1 = arith.constant 0 : i32
    return %c0_i32, %c0_i32_0 : i32, i32
  }
  func.func @transform_5(%arg0: i32, %arg1: i32) -> (i32, i32) {
    %c0_i32 = arith.constant 0 : i32
    %c0_i32_0 = arith.constant 0 : i32
    %c0_i32_1 = arith.constant 0 : i32
    return %c0_i32, %c0_i32_0 : i32, i32
  }
  func.func @transform_6(%arg0: i32, %arg1: i32) -> (i32, i32) {
    %c0_i32 = arith.constant 0 : i32
    %c0_i32_0 = arith.constant 0 : i32
    %c0_i32_1 = arith.constant 0 : i32
    return %c0_i32, %c0_i32_0 : i32, i32
  }
  func.func @transform_7(%arg0: i32, %arg1: i32) -> (i32, i32) {
    %c0_i32 = arith.constant 0 : i32
    %c0_i32_0 = arith.constant 0 : i32
    return %arg0, %c0_i32 : i32, i32
  }
  func.func @transform_8(%arg0: i32, %arg1: i32) -> (i32, i32) {
    %c0_i32 = arith.constant 0 : i32
    %c0_i32_0 = arith.constant 0 : i32
    return %arg0, %c0_i32 : i32, i32
  }
}

</mosaic_0001>

<llo_original>
// kernel: tpu_custom_call.1
$region0: #{tpu_custom_call.1}
  #allocation0 [shape = 'u32[]', space=smem, size = 0x4, offset = 0x4, fixed_abs, tag = 'smem constant byte address 0x4 - core index']
  #allocation1 [shape = 'u32[144,128]{1,0:T(1,128)}', space=vmem, size = 0x12000, scoped, tag = 'internal scratch']
  #allocation2 [shape = 'f32[8,32]{1,0:T(8,128)}', space=vmem, size = 0x1000, scoped, tag = 'scratch operand']
  %s0 = inlined_call_operand.vmem [shape: f32[8,32], index: 0, kind: input, shape index: {}]
  %s1 = inlined_call_operand.vmem [shape: f32[1,8,8,1], index: 1, kind: input, shape index: {}]
  %s2 = inlined_call_operand.vmem [shape: f32[1,32], index: 2, kind: input, shape index: {}]
  %s3 = inlined_call_operand.vmem [shape: f32[1,32], index: 3, kind: input, shape index: {}]
  %s4 = inlined_call_operand.vmem [shape: f32[32,32], index: 4, kind: input, shape index: {}]
  %s5 = inlined_call_operand.vmem [shape: f32[32,128], index: 5, kind: input, shape index: {}]
  %s6 = inlined_call_operand.vmem [shape: f32[1,128], index: 6, kind: input, shape index: {}]
  %s7 = inlined_call_operand.hbm [shape: f32[8,128], index: 7, kind: output, shape index: {0}]
  %s8 = inlined_call_operand.hbm [shape: f32[8,32], index: 8, kind: output, shape index: {1}]
  %9 = xla_tuple %s7, %s8
  %s10 = sld [smem:[#allocation0]]
  $region54: #{tpu_custom_call.1} parent=0
    _
  %s12 = ssub.s32 1, %s10
  %s13 = scalar_select 0, %s12, %s10
  $region1: #{tpu_custom_call.1} parent=0
    #allocation3 [shape = 'u8[4096]{0}', space=vmem, size = 0x1000, scoped, tag = 'output window, operand 0, single buffered']
    #allocation4 [shape = 's32[1]{0}', space=sflag, size = 0x4, scoped, tag = 'scoped memory for tpu_custom_call.1']
    #allocation5 [shape = 'u8[4096]{0}', space=vmem, size = 0x1000, scoped, tag = 'output window, operand 1, single buffered']
    #allocation6 [shape = 's32[1]{0}', space=sflag, size = 0x4, scoped, tag = 'scoped memory for tpu_custom_call.1']
    %14 = vsyncpa [#allocation4], 0
    %15 = vsyncpa [#allocation6], 0
    // Predicated region
    $region2: #{tpu_custom_call.1} parent=1 // pred_check
      _
    $region3: #{tpu_custom_call.1} parent=1 // pred_check_branch
      %17 = sbr.rel (0) target = $region5
    $region4: #{tpu_custom_call.1} parent=1 // pred_region
      _
    $region5: #{tpu_custom_call.1} parent=1 // pred_fallthru
      _
    // Predicated region
    $region6: #{tpu_custom_call.1} parent=1 // pred_check
      _
    $region7: #{tpu_custom_call.1} parent=1 // pred_check_branch
      %19 = sbr.rel (0) target = $region9
    $region8: #{tpu_custom_call.1} parent=1 // pred_region
      _
    $region9: #{tpu_custom_call.1} parent=1 // pred_fallthru
      _
    // Predicated region
    $region10: #{tpu_custom_call.1} parent=1 // pred_check
      _
    $region11: #{tpu_custom_call.1} parent=1 // pred_check_branch
      %21 = sbr.rel (0) target = $region13
    $region12: #{tpu_custom_call.1} parent=1 // pred_region
      _
    $region13: #{tpu_custom_call.1} parent=1 // pred_fallthru
      _
    // Predicated region
    $region14: #{tpu_custom_call.1} parent=1 // pred_check
      _
    $region15: #{tpu_custom_call.1} parent=1 // pred_check_branch
      %23 = sbr.rel (0) target = $region17
    $region16: #{tpu_custom_call.1} parent=1 // pred_region
      _
    $region17: #{tpu_custom_call.1} parent=1 // pred_fallthru
      _
    // Predicated region
    $region18: #{tpu_custom_call.1} parent=1 // pred_check
      _
    $region19: #{tpu_custom_call.1} parent=1 // pred_check_branch
      %25 = sbr.rel (0) target = $region21
    $region20: #{tpu_custom_call.1} parent=1 // pred_region
      _
    $region21: #{tpu_custom_call.1} parent=1 // pred_fallthru
      _
    // Predicated region
    $region22: #{tpu_custom_call.1} parent=1 // pred_check
      _
    $region23: #{tpu_custom_call.1} parent=1 // pred_check_branch
      %27 = sbr.rel (0) target = $region25
    $region24: #{tpu_custom_call.1} parent=1 // pred_region
      _
    $region25: #{tpu_custom_call.1} parent=1 // pred_fallthru
      _
    // Predicated region
    $region26: #{tpu_custom_call.1} parent=1 // pred_check
      _
    $region27: #{tpu_custom_call.1} parent=1 // pred_check_branch
      %29 = sbr.rel (0) target = $region29
    $region28: #{tpu_custom_call.1} parent=1 // pred_region
      _
    $region29: #{tpu_custom_call.1} parent=1 // pred_fallthru
      _
    %p30 = scmp.eq.s32.totalorder 0, 0
    // Predicated region
    $region30: #{tpu_custom_call.1} parent=1 // pred_check
      %p31 = pneg %p30
    $region31: #{tpu_custom_call.1} parent=1 // pred_check_branch
      %33 = sbr.rel (%p31) target = $region33
    $region32: #{tpu_custom_call.1} parent=1 // pred_region
      %v34 = vld [vmem:[%s0] sm:$0xff]
      %vm35 = vcmask 261120
      %36 = vst.msk [vmem:[#allocation2] sm:$0xff] %vm35, %v34
    $region33: #{tpu_custom_call.1} parent=1 // pred_fallthru
      _
    %v37 = vld [vmem:[%s4] sm:$0xff]
    %v38 = vld [vmem:[%s4 + $0x8] sm:$0xff]
    %v39 = vld [vmem:[%s4 + $0x10] sm:$0xff]
    %v40 = vld [vmem:[%s4 + $0x18] sm:$0xff]
    %v41 = vld [vmem:[%s3] sm:$0x1]
    %v42 = vld [vmem:[#allocation2] sm:$0xff]
    %v43 = vld [vmem:[%s1] sm:$0xff]
    %v44 = vld [vmem:[%s2] sm:$0x1]
    %46 = vset.pattern.permute.xlu0 0
    %47 = vperm.xlu0 %46, %v43
    %v48 = vpop.permute.xlu0 %47
    %v51 = vlaneseq
    %v52 = vshrl.u32 %v51, 7
    %v53 = vsub.s32 0, %v52
    %v54 = vrot.slane %v44, %v53
    %v56 = vmul.f32 %v48, %v54
    %v58 = vlaneseq
    %v59 = vshrl.u32 %v58, 7
    %v60 = vsub.s32 0, %v59
    %v61 = vrot.slane %v41, %v60
    %v63 = vadd.f32 %v56, %v61
    %vm64 = vcmask 261120
    %v66 = vsel %vm64, %v42, 0
    %68 = vmatprep.subr.mxu0 0.0
    %69 = vmatpush1.msra.mxu0 %v37
    %70 = vmatprep.subr.mxu0 0.0
    %71 = vmatpush1.msra.mxu0 %v38
    %72 = vmatprep.subr.mxu0 0.0
    %73 = vmatpush1.msra.mxu0 %v39
    %74 = vmatprep.subr.mxu0 0.0
    %75 = vmatpush1.msra.mxu0 %v40
    %76 = vmatprep.subr.mxu0 0.0
    %77 = vmatpush1.msra.mxu0 0.0
    %78 = vmatprep.subr.mxu0 0.0
    %79 = vmatpush1.msra.mxu0 0.0
    %80 = vmatprep.subr.mxu0 0.0
    %81 = vmatpush1.msra.mxu0 0.0
    %82 = vmatprep.subr.mxu0 0.0
    %83 = vmatpush1.msra.mxu0 0.0
    %84 = vmatprep.subr.mxu0 0.0
    %85 = vmatpush1.msra.mxu0 0.0
    %86 = vmatprep.subr.mxu0 0.0
    %87 = vmatpush1.msra.mxu0 0.0
    %88 = vmatprep.subr.mxu0 0.0
    %89 = vmatpush1.msra.mxu0 0.0
    %90 = vmatprep.subr.mxu0 0.0
    %91 = vmatpush1.msra.mxu0 0.0
    %92 = vmatprep.subr.mxu0 0.0
    %93 = vmatpush1.msra.mxu0 0.0
    %94 = vmatprep.subr.mxu0 0.0
    %95 = vmatpush1.msra.mxu0 0.0
    %96 = vmatprep.subr.mxu0 0.0
    %97 = vmatpush1.msra.mxu0 0.0
    %98 = vmatprep.subr.mxu0 0.0
    %99 = vmatpush1.msra.mxu0 0.0
    %100 = vmatprep.subr.mxu0 0.0
    %101 = vmatpush1.msra.mxu0 0.0
    %102 = vmatprep.subr.mxu0 0.0
    %103 = vmatpush1.msra.mxu0 0.0
    %104 = vmatprep.subr.mxu0 0.0
    %105 = vmatpush1.msra.mxu0 0.0
    %106 = vmatprep.subr.mxu0 0.0
    %107 = vmatpush1.msra.mxu0 0.0
    %108 = vmatprep.subr.mxu0 0.0
    %109 = vmatpush1.msra.mxu0 0.0
    %110 = vmatprep.subr.mxu0 0.0
    %111 = vmatpush1.msra.mxu0 0.0
    %112 = vmatprep.subr.mxu0 0.0
    %113 = vmatpush1.msra.mxu0 0.0
    %114 = vmatprep.subr.mxu0 0.0
    %115 = vmatpush1.msra.mxu0 0.0
    %116 = vmatprep.subr.mxu0 0.0
    %117 = vmatpush1.msra.mxu0 0.0
    %118 = vmatprep.subr.mxu0 0.0
    %119 = vmatpush1.msra.mxu0 0.0
    %120 = vmatprep.subr.mxu0 0.0
    %121 = vmatpush1.msra.mxu0 0.0
    %122 = vmatprep.subr.mxu0 0.0
    %123 = vmatpush1.msra.mxu0 0.0
    %124 = vmatprep.subr.mxu0 0.0
    %125 = vmatpush1.msra.mxu0 0.0
    %126 = vmatprep.subr.mxu0 0.0
    %127 = vmatpush1.msra.mxu0 0.0
    %128 = vmatprep.subr.mxu0 0.0
    %129 = vmatpush1.msra.mxu0 0.0
    %130 = vmatprep.subr.mxu0 0.0
    %131 = vmatpush1.msra.mxu0 0.0
    %132 = vmatprep.mubr.f32.mxu0 0.0
    %133 = vmatmul.mubr.f32.gmra.mrb[0].mxu0 %v66
    %v134 = vpop.f32.mrb[0].mxu0
    %v135 = vadd.f32 0.0, %v134
    %v136 = vpop.f32.mrb[0].mxu0
    %137 = vdwg.mxu0
    %v138 = vadd.f32 %v63, %v135
    %v139 = vtanh.pop %v138
    %s140 = scalar_lea.vmem %s1, 8
    %v141 = vld [vmem:[%s140] sm:$0xff]
    %143 = vset.pattern.permute.xlu0 0
    %144 = vperm.xlu0 %143, %v141
    %v145 = vpop.permute.xlu0 %144
    %v147 = vmul.f32 %v145, %v54
    %v148 = vadd.f32 %v147, %v61
    %v150 = vsel %vm64, %v139, 0
    %152 = vmatprep.subr.mxu0 0.0
    %153 = vmatpush1.msra.mxu0 %v37
    %154 = vmatprep.subr.mxu0 0.0
    %155 = vmatpush1.msra.mxu0 %v38
    %156 = vmatprep.subr.mxu0 0.0
    %157 = vmatpush1.msra.mxu0 %v39
    %158 = vmatprep.subr.mxu0 0.0
    %159 = vmatpush1.msra.mxu0 %v40
    %160 = vmatprep.subr.mxu0 0.0
    %161 = vmatpush1.msra.mxu0 0.0
    %162 = vmatprep.subr.mxu0 0.0
    %163 = vmatpush1.msra.mxu0 0.0
    %164 = vmatprep.subr.mxu0 0.0
    %165 = vmatpush1.msra.mxu0 0.0
    %166 = vmatprep.subr.mxu0 0.0
    %167 = vmatpush1.msra.mxu0 0.0
    %168 = vmatprep.subr.mxu0 0.0
    %169 = vmatpush1.msra.mxu0 0.0
    %170 = vmatprep.subr.mxu0 0.0
    %171 = vmatpush1.msra.mxu0 0.0
    %172 = vmatprep.subr.mxu0 0.0
    %173 = vmatpush1.msra.mxu0 0.0
    %174 = vmatprep.subr.mxu0 0.0
    %175 = vmatpush1.msra.mxu0 0.0
    %176 = vmatprep.subr.mxu0 0.0
    %177 = vmatpush1.msra.mxu0 0.0
    %178 = vmatprep.subr.mxu0 0.0
    %179 = vmatpush1.msra.mxu0 0.0
    %180 = vmatprep.subr.mxu0 0.0
    %181 = vmatpush1.msra.mxu0 0.0
    %182 = vmatprep.subr.mxu0 0.0
    %183 = vmatpush1.msra.mxu0 0.0
    %184 = vmatprep.subr.mxu0 0.0
    %185 = vmatpush1.msra.mxu0 0.0
    %186 = vmatprep.subr.mxu0 0.0
    %187 = vmatpush1.msra.mxu0 0.0
    %188 = vmatprep.subr.mxu0 0.0
    %189 = vmatpush1.msra.mxu0 0.0
    %190 = vmatprep.subr.mxu0 0.0
    %191 = vmatpush1.msra.mxu0 0.0
    %192 = vmatprep.subr.mxu0 0.0
    %193 = vmatpush1.msra.mxu0 0.0
    %194 = vmatprep.subr.mxu0 0.0
    %195 = vmatpush1.msra.mxu0 0.0
    %196 = vmatprep.subr.mxu0 0.0
    %197 = vmatpush1.msra.mxu0 0.0
    %198 = vmatprep.subr.mxu0 0.0
    %199 = vmatpush1.msra.mxu0 0.0
    %200 = vmatprep.subr.mxu0 0.0
    %201 = vmatpush1.msra.mxu0 0.0
    %202 = vmatprep.subr.mxu0 0.0
    %203 = vmatpush1.msra.mxu0 0.0
    %204 = vmatprep.subr.mxu0 0.0
    %205 = vmatpush1.msra.mxu0 0.0
    %206 = vmatprep.subr.mxu0 0.0
    %207 = vmatpush1.msra.mxu0 0.0
    %208 = vmatprep.subr.mxu0 0.0
    %209 = vmatpush1.msra.mxu0 0.0
    %210 = vmatprep.subr.mxu0 0.0
    %211 = vmatpush1.msra.mxu0 0.0
    %212 = vmatprep.subr.mxu0 0.0
    %213 = vmatpush1.msra.mxu0 0.0
    %214 = vmatprep.subr.mxu0 0.0
    %215 = vmatpush1.msra.mxu0 0.0
    %216 = vmatprep.mubr.f32.mxu0 0.0
    %217 = vmatmul.mubr.f32.gmra.mrb[0].mxu0 %v150
    %v218 = vpop.f32.mrb[0].mxu0
    %v219 = vadd.f32 0.0, %v218
    %v220 = vpop.f32.mrb[0].mxu0
    %221 = vdwg.mxu0
    %v222 = vadd.f32 %v148, %v219
    %v223 = vtanh.pop %v222
    %s224 = scalar_lea.vmem %s1, 16
    %v225 = vld [vmem:[%s224] sm:$0xff]
    %227 = vset.pattern.permute.xlu0 0
    %228 = vperm.xlu0 %227, %v225
    %v229 = vpop.permute.xlu0 %228
    %v231 = vmul.f32 %v229, %v54
    %v232 = vadd.f32 %v231, %v61
    %v234 = vsel %vm64, %v223, 0
    %236 = vmatprep.subr.mxu0 0.0
    %237 = vmatpush1.msra.mxu0 %v37
    %238 = vmatprep.subr.mxu0 0.0
    %239 = vmatpush1.msra.mxu0 %v38
    %240 = vmatprep.subr.mxu0 0.0
    %241 = vmatpush1.msra.mxu0 %v39
    %242 = vmatprep.subr.mxu0 0.0
    %243 = vmatpush1.msra.mxu0 %v40
    %244 = vmatprep.subr.mxu0 0.0
    %245 = vmatpush1.msra.mxu0 0.0
    %246 = vmatprep.subr.mxu0 0.0
    %247 = vmatpush1.msra.mxu0 0.0
    %248 = vmatprep.subr.mxu0 0.0
    %249 = vmatpush1.msra.mxu0 0.0
    %250 = vmatprep.subr.mxu0 0.0
    %251 = vmatpush1.msra.mxu0 0.0
    %252 = vmatprep.subr.mxu0 0.0
    %253 = vmatpush1.msra.mxu0 0.0
    %254 = vmatprep.subr.mxu0 0.0
    %255 = vmatpush1.msra.mxu0 0.0
    %256 = vmatprep.subr.mxu0 0.0
    %257 = vmatpush1.msra.mxu0 0.0
    %258 = vmatprep.subr.mxu0 0.0
    %259 = vmatpush1.msra.mxu0 0.0
    %260 = vmatprep.subr.mxu0 0.0
    %261 = vmatpush1.msra.mxu0 0.0
    %262 = vmatprep.subr.mxu0 0.0
    %263 = vmatpush1.msra.mxu0 0.0
    %264 = vmatprep.subr.mxu0 0.0
    %265 = vmatpush1.msra.mxu0 0.0
    %266 = vmatprep.subr.mxu0 0.0
    %267 = vmatpush1.msra.mxu0 0.0
    %268 = vmatprep.subr.mxu0 0.0
    %269 = vmatpush1.msra.mxu0 0.0
    %270 = vmatprep.subr.mxu0 0.0
    %271 = vmatpush1.msra.mxu0 0.0
    %272 = vmatprep.subr.mxu0 0.0
    %273 = vmatpush1.msra.mxu0 0.0
    %274 = vmatprep.subr.mxu0 0.0
    %275 = vmatpush1.msra.mxu0 0.0
    %276 = vmatprep.subr.mxu0 0.0
    %277 = vmatpush1.msra.mxu0 0.0
    %278 = vmatprep.subr.mxu0 0.0
    %279 = vmatpush1.msra.mxu0 0.0
    %280 = vmatprep.subr.mxu0 0.0
    %281 = vmatpush1.msra.mxu0 0.0
    %282 = vmatprep.subr.mxu0 0.0
    %283 = vmatpush1.msra.mxu0 0.0
    %284 = vmatprep.subr.mxu0 0.0
    %285 = vmatpush1.msra.mxu0 0.0
    %286 = vmatprep.subr.mxu0 0.0
    %287 = vmatpush1.msra.mxu0 0.0
    %288 = vmatprep.subr.mxu0 0.0
    %289 = vmatpush1.msra.mxu0 0.0
    %290 = vmatprep.subr.mxu0 0.0
    %291 = vmatpush1.msra.mxu0 0.0
    %292 = vmatprep.subr.mxu0 0.0
    %293 = vmatpush1.msra.mxu0 0.0
    %294 = vmatprep.subr.mxu0 0.0
    %295 = vmatpush1.msra.mxu0 0.0
    %296 = vmatprep.subr.mxu0 0.0
    %297 = vmatpush1.msra.mxu0 0.0
    %298 = vmatprep.subr.mxu0 0.0
    %299 = vmatpush1.msra.mxu0 0.0
    %300 = vmatprep.mubr.f32.mxu0 0.0
    %301 = vmatmul.mubr.f32.gmra.mrb[0].mxu0 %v234
    %v302 = vpop.f32.mrb[0].mxu0
    %v303 = vadd.f32 0.0, %v302
    %v304 = vpop.f32.mrb[0].mxu0
    %305 = vdwg.mxu0
    %v306 = vadd.f32 %v232, %v303
    %v307 = vtanh.pop %v306
    %s308 = scalar_lea.vmem %s1, 24
    %v309 = vld [vmem:[%s308] sm:$0xff]
    %311 = vset.pattern.permute.xlu0 0
    %312 = vperm.xlu0 %311, %v309
    %v313 = vpop.permute.xlu0 %312
    %v315 = vmul.f32 %v313, %v54
    %v316 = vadd.f32 %v315, %v61
    %v318 = vsel %vm64, %v307, 0
    %320 = vmatprep.subr.mxu0 0.0
    %321 = vmatpush1.msra.mxu0 %v37
    %322 = vmatprep.subr.mxu0 0.0
    %323 = vmatpush1.msra.mxu0 %v38
    %324 = vmatprep.subr.mxu0 0.0
    %325 = vmatpush1.msra.mxu0 %v39
    %326 = vmatprep.subr.mxu0 0.0
    %327 = vmatpush1.msra.mxu0 %v40
    %328 = vmatprep.subr.mxu0 0.0
    %329 = vmatpush1.msra.mxu0 0.0
    %330 = vmatprep.subr.mxu0 0.0
    %331 = vmatpush1.msra.mxu0 0.0
    %332 = vmatprep.subr.mxu0 0.0
    %333 = vmatpush1.msra.mxu0 0.0
    %334 = vmatprep.subr.mxu0 0.0
    %335 = vmatpush1.msra.mxu0 0.0
    %336 = vmatprep.subr.mxu0 0.0
    %337 = vmatpush1.msra.mxu0 0.0
    %338 = vmatprep.subr.mxu0 0.0
    %339 = vmatpush1.msra.mxu0 0.0
    %340 = vmatprep.subr.mxu0 0.0
    %341 = vmatpush1.msra.mxu0 0.0
    %342 = vmatprep.subr.mxu0 0.0
    %343 = vmatpush1.msra.mxu0 0.0
    %344 = vmatprep.subr.mxu0 0.0
    %345 = vmatpush1.msra.mxu0 0.0
    %346 = vmatprep.subr.mxu0 0.0
    %347 = vmatpush1.msra.mxu0 0.0
    %348 = vmatprep.subr.mxu0 0.0
    %349 = vmatpush1.msra.mxu0 0.0
    %350 = vmatprep.subr.mxu0 0.0
    %351 = vmatpush1.msra.mxu0 0.0
    %352 = vmatprep.subr.mxu0 0.0
    %353 = vmatpush1.msra.mxu0 0.0
    %354 = vmatprep.subr.mxu0 0.0
    %355 = vmatpush1.msra.mxu0 0.0
    %356 = vmatprep.subr.mxu0 0.0
    %357 = vmatpush1.msra.mxu0 0.0
    %358 = vmatprep.subr.mxu0 0.0
    %359 = vmatpush1.msra.mxu0 0.0
    %360 = vmatprep.subr.mxu0 0.0
    %361 = vmatpush1.msra.mxu0 0.0
    %362 = vmatprep.subr.mxu0 0.0
    %363 = vmatpush1.msra.mxu0 0.0
    %364 = vmatprep.subr.mxu0 0.0
    %365 = vmatpush1.msra.mxu0 0.0
    %366 = vmatprep.subr.mxu0 0.0
    %367 = vmatpush1.msra.mxu0 0.0
    %368 = vmatprep.subr.mxu0 0.0
    %369 = vmatpush1.msra.mxu0 0.0
    %370 = vmatprep.subr.mxu0 0.0
    %371 = vmatpush1.msra.mxu0 0.0
    %372 = vmatprep.subr.mxu0 0.0
    %373 = vmatpush1.msra.mxu0 0.0
    %374 = vmatprep.subr.mxu0 0.0
    %375 = vmatpush1.msra.mxu0 0.0
    %376 = vmatprep.subr.mxu0 0.0
    %377 = vmatpush1.msra.mxu0 0.0
    %378 = vmatprep.subr.mxu0 0.0
    %379 = vmatpush1.msra.mxu0 0.0
    %380 = vmatprep.subr.mxu0 0.0
    %381 = vmatpush1.msra.mxu0 0.0
    %382 = vmatprep.subr.mxu0 0.0
    %383 = vmatpush1.msra.mxu0 0.0
    %384 = vmatprep.mubr.f32.mxu0 0.0
    %385 = vmatmul.mubr.f32.gmra.mrb[0].mxu0 %v318
    %v386 = vpop.f32.mrb[0].mxu0
    %v387 = vadd.f32 0.0, %v386
    %v388 = vpop.f32.mrb[0].mxu0
    %389 = vdwg.mxu0
    %v390 = vadd.f32 %v316, %v387
    %v391 = vtanh.pop %v390
    %s392 = scalar_lea.vmem %s1, 32
    %v393 = vld [vmem:[%s392] sm:$0xff]
    %395 = vset.pattern.permute.xlu0 0
    %396 = vperm.xlu0 %395, %v393
    %v397 = vpop.permute.xlu0 %396
    %v399 = vmul.f32 %v397, %v54
    %v400 = vadd.f32 %v399, %v61
    %v402 = vsel %vm64, %v391, 0
    %404 = vmatprep.subr.mxu0 0.0
    %405 = vmatpush1.msra.mxu0 %v37
    %406 = vmatprep.subr.mxu0 0.0
    %407 = vmatpush1.msra.mxu0 %v38
    %408 = vmatprep.subr.mxu0 0.0
    %409 = vmatpush1.msra.mxu0 %v39
    %410 = vmatprep.subr.mxu0 0.0
    %411 = vmatpush1.msra.mxu0 %v40
    %412 = vmatprep.subr.mxu0 0.0
    %413 = vmatpush1.msra.mxu0 0.0
    %414 = vmatprep.subr.mxu0 0.0
    %415 = vmatpush1.msra.mxu0 0.0
    %416 = vmatprep.subr.mxu0 0.0
    %417 = vmatpush1.msra.mxu0 0.0
    %418 = vmatprep.subr.mxu0 0.0
    %419 = vmatpush1.msra.mxu0 0.0
    %420 = vmatprep.subr.mxu0 0.0
    %421 = vmatpush1.msra.mxu0 0.0
    %422 = vmatprep.subr.mxu0 0.0
    %423 = vmatpush1.msra.mxu0 0.0
    %424 = vmatprep.subr.mxu0 0.0
    %425 = vmatpush1.msra.mxu0 0.0
    %426 = vmatprep.subr.mxu0 0.0
    %427 = vmatpush1.msra.mxu0 0.0
    %428 = vmatprep.subr.mxu0 0.0
    %429 = vmatpush1.msra.mxu0 0.0
    %430 = vmatprep.subr.mxu0 0.0
    %431 = vmatpush1.msra.mxu0 0.0
    %432 = vmatprep.subr.mxu0 0.0
    %433 = vmatpush1.msra.mxu0 0.0
    %434 = vmatprep.subr.mxu0 0.0
    %435 = vmatpush1.msra.mxu0 0.0
    %436 = vmatprep.subr.mxu0 0.0
    %437 = vmatpush1.msra.mxu0 0.0
    %438 = vmatprep.subr.mxu0 0.0
    %439 = vmatpush1.msra.mxu0 0.0
    %440 = vmatprep.subr.mxu0 0.0
    %441 = vmatpush1.msra.mxu0 0.0
    %442 = vmatprep.subr.mxu0 0.0
    %443 = vmatpush1.msra.mxu0 0.0
    %444 = vmatprep.subr.mxu0 0.0
    %445 = vmatpush1.msra.mxu0 0.0
    %446 = vmatprep.subr.mxu0 0.0
    %447 = vmatpush1.msra.mxu0 0.0
    %448 = vmatprep.subr.mxu0 0.0
    %449 = vmatpush1.msra.mxu0 0.0
    %450 = vmatprep.subr.mxu0 0.0
    %451 = vmatpush1.msra.mxu0 0.0
    %452 = vmatprep.subr.mxu0 0.0
    %453 = vmatpush1.msra.mxu0 0.0
    %454 = vmatprep.subr.mxu0 0.0
    %455 = vmatpush1.msra.mxu0 0.0
    %456 = vmatprep.subr.mxu0 0.0
    %457 = vmatpush1.msra.mxu0 0.0
    %458 = vmatprep.subr.mxu0 0.0
    %459 = vmatpush1.msra.mxu0 0.0
    %460 = vmatprep.subr.mxu0 0.0
    %461 = vmatpush1.msra.mxu0 0.0
    %462 = vmatprep.subr.mxu0 0.0
    %463 = vmatpush1.msra.mxu0 0.0
    %464 = vmatprep.subr.mxu0 0.0
    %465 = vmatpush1.msra.mxu0 0.0
    %466 = vmatprep.subr.mxu0 0.0
    %467 = vmatpush1.msra.mxu0 0.0
    %468 = vmatprep.mubr.f32.mxu0 0.0
    %469 = vmatmul.mubr.f32.gmra.mrb[0].mxu0 %v402
    %v470 = vpop.f32.mrb[0].mxu0
    %v471 = vadd.f32 0.0, %v470
    %v472 = vpop.f32.mrb[0].mxu0
    %473 = vdwg.mxu0
    %v474 = vadd.f32 %v400, %v471
    %v475 = vtanh.pop %v474
    %s476 = scalar_lea.vmem %s1, 40
    %v477 = vld [vmem:[%s476] sm:$0xff]
    %479 = vset.pattern.permute.xlu0 0
    %480 = vperm.xlu0 %479, %v477
    %v481 = vpop.permute.xlu0 %480
    %v483 = vmul.f32 %v481, %v54
    %v484 = vadd.f32 %v483, %v61
    %v486 = vsel %vm64, %v475, 0
    %488 = vmatprep.subr.mxu0 0.0
    %489 = vmatpush1.msra.mxu0 %v37
    %490 = vmatprep.subr.mxu0 0.0
    %491 = vmatpush1.msra.mxu0 %v38
    %492 = vmatprep.subr.mxu0 0.0
    %493 = vmatpush1.msra.mxu0 %v39
    %494 = vmatprep.subr.mxu0 0.0
    %495 = vmatpush1.msra.mxu0 %v40
    %496 = vmatprep.subr.mxu0 0.0
    %497 = vmatpush1.msra.mxu0 0.0
    %498 = vmatprep.subr.mxu0 0.0
    %499 = vmatpush1.msra.mxu0 0.0
    %500 = vmatprep.subr.mxu0 0.0
    %501 = vmatpush1.msra.mxu0 0.0
    %502 = vmatprep.subr.mxu0 0.0
    %503 = vmatpush1.msra.mxu0 0.0
    %504 = vmatprep.subr.mxu0 0.0
    %505 = vmatpush1.msra.mxu0 0.0
    %506 = vmatprep.subr.mxu0 0.0
    %507 = vmatpush1.msra.mxu0 0.0
    %508 = vmatprep.subr.mxu0 0.0
    %509 = vmatpush1.msra.mxu0 0.0
    %510 = vmatprep.subr.mxu0 0.0
    %511 = vmatpush1.msra.mxu0 0.0
    %512 = vmatprep.subr.mxu0 0.0
    %513 = vmatpush1.msra.mxu0 0.0
    %514 = vmatprep.subr.mxu0 0.0
    %515 = vmatpush1.msra.mxu0 0.0
    %516 = vmatprep.subr.mxu0 0.0
    %517 = vmatpush1.msra.mxu0 0.0
    %518 = vmatprep.subr.mxu0 0.0
    %519 = vmatpush1.msra.mxu0 0.0
    %520 = vmatprep.subr.mxu0 0.0
    %521 = vmatpush1.msra.mxu0 0.0
    %522 = vmatprep.subr.mxu0 0.0
    %523 = vmatpush1.msra.mxu0 0.0
    %524 = vmatprep.subr.mxu0 0.0
    %525 = vmatpush1.msra.mxu0 0.0
    %526 = vmatprep.subr.mxu0 0.0
    %527 = vmatpush1.msra.mxu0 0.0
    %528 = vmatprep.subr.mxu0 0.0
    %529 = vmatpush1.msra.mxu0 0.0
    %530 = vmatprep.subr.mxu0 0.0
    %531 = vmatpush1.msra.mxu0 0.0
    %532 = vmatprep.subr.mxu0 0.0
    %533 = vmatpush1.msra.mxu0 0.0
    %534 = vmatprep.subr.mxu0 0.0
    %535 = vmatpush1.msra.mxu0 0.0
    %536 = vmatprep.subr.mxu0 0.0
    %537 = vmatpush1.msra.mxu0 0.0
    %538 = vmatprep.subr.mxu0 0.0
    %539 = vmatpush1.msra.mxu0 0.0
    %540 = vmatprep.subr.mxu0 0.0
    %541 = vmatpush1.msra.mxu0 0.0
    %542 = vmatprep.subr.mxu0 0.0
    %543 = vmatpush1.msra.mxu0 0.0
    %544 = vmatprep.subr.mxu0 0.0
    %545 = vmatpush1.msra.mxu0 0.0
    %546 = vmatprep.subr.mxu0 0.0
    %547 = vmatpush1.msra.mxu0 0.0
    %548 = vmatprep.subr.mxu0 0.0
    %549 = vmatpush1.msra.mxu0 0.0
    %550 = vmatprep.subr.mxu0 0.0
    %551 = vmatpush1.msra.mxu0 0.0
    %552 = vmatprep.mubr.f32.mxu0 0.0
    %553 = vmatmul.mubr.f32.gmra.mrb[0].mxu0 %v486
    %v554 = vpop.f32.mrb[0].mxu0
    %v555 = vadd.f32 0.0, %v554
    %v556 = vpop.f32.mrb[0].mxu0
    %557 = vdwg.mxu0
    %v558 = vadd.f32 %v484, %v555
    %v559 = vtanh.pop %v558
    %s560 = scalar_lea.vmem %s1, 48
    %v561 = vld [vmem:[%s560] sm:$0xff]
    %563 = vset.pattern.permute.xlu0 0
    %564 = vperm.xlu0 %563, %v561
    %v565 = vpop.permute.xlu0 %564
    %v567 = vmul.f32 %v565, %v54
    %v568 = vadd.f32 %v567, %v61
    %v570 = vsel %vm64, %v559, 0
    %572 = vmatprep.subr.mxu0 0.0
    %573 = vmatpush1.msra.mxu0 %v37
    %574 = vmatprep.subr.mxu0 0.0
    %575 = vmatpush1.msra.mxu0 %v38
    %576 = vmatprep.subr.mxu0 0.0
    %577 = vmatpush1.msra.mxu0 %v39
    %578 = vmatprep.subr.mxu0 0.0
    %579 = vmatpush1.msra.mxu0 %v40
    %580 = vmatprep.subr.mxu0 0.0
    %581 = vmatpush1.msra.mxu0 0.0
    %582 = vmatprep.subr.mxu0 0.0
    %583 = vmatpush1.msra.mxu0 0.0
    %584 = vmatprep.subr.mxu0 0.0
    %585 = vmatpush1.msra.mxu0 0.0
    %586 = vmatprep.subr.mxu0 0.0
    %587 = vmatpush1.msra.mxu0 0.0
    %588 = vmatprep.subr.mxu0 0.0
    %589 = vmatpush1.msra.mxu0 0.0
    %590 = vmatprep.subr.mxu0 0.0
    %591 = vmatpush1.msra.mxu0 0.0
    %592 = vmatprep.subr.mxu0 0.0
    %593 = vmatpush1.msra.mxu0 0.0
    %594 = vmatprep.subr.mxu0 0.0
    %595 = vmatpush1.msra.mxu0 0.0
    %596 = vmatprep.subr.mxu0 0.0
    %597 = vmatpush1.msra.mxu0 0.0
    %598 = vmatprep.subr.mxu0 0.0
    %599 = vmatpush1.msra.mxu0 0.0
    %600 = vmatprep.subr.mxu0 0.0
    %601 = vmatpush1.msra.mxu0 0.0
    %602 = vmatprep.subr.mxu0 0.0
    %603 = vmatpush1.msra.mxu0 0.0
    %604 = vmatprep.subr.mxu0 0.0
    %605 = vmatpush1.msra.mxu0 0.0
    %606 = vmatprep.subr.mxu0 0.0
    %607 = vmatpush1.msra.mxu0 0.0
    %608 = vmatprep.subr.mxu0 0.0
    %609 = vmatpush1.msra.mxu0 0.0
    %610 = vmatprep.subr.mxu0 0.0
    %611 = vmatpush1.msra.mxu0 0.0
    %612 = vmatprep.subr.mxu0 0.0
    %613 = vmatpush1.msra.mxu0 0.0
    %614 = vmatprep.subr.mxu0 0.0
    %615 = vmatpush1.msra.mxu0 0.0
    %616 = vmatprep.subr.mxu0 0.0
    %617 = vmatpush1.msra.mxu0 0.0
    %618 = vmatprep.subr.mxu0 0.0
    %619 = vmatpush1.msra.mxu0 0.0
    %620 = vmatprep.subr.mxu0 0.0
    %621 = vmatpush1.msra.mxu0 0.0
    %622 = vmatprep.subr.mxu0 0.0
    %623 = vmatpush1.msra.mxu0 0.0
    %624 = vmatprep.subr.mxu0 0.0
    %625 = vmatpush1.msra.mxu0 0.0
    %626 = vmatprep.subr.mxu0 0.0
    %627 = vmatpush1.msra.mxu0 0.0
    %628 = vmatprep.subr.mxu0 0.0
    %629 = vmatpush1.msra.mxu0 0.0
    %630 = vmatprep.subr.mxu0 0.0
    %631 = vmatpush1.msra.mxu0 0.0
    %632 = vmatprep.subr.mxu0 0.0
    %633 = vmatpush1.msra.mxu0 0.0
    %634 = vmatprep.subr.mxu0 0.0
    %635 = vmatpush1.msra.mxu0 0.0
    %636 = vmatprep.mubr.f32.mxu0 0.0
    %637 = vmatmul.mubr.f32.gmra.mrb[0].mxu0 %v570
    %v638 = vpop.f32.mrb[0].mxu0
    %v639 = vadd.f32 0.0, %v638
    %v640 = vpop.f32.mrb[0].mxu0
    %641 = vdwg.mxu0
    %v642 = vadd.f32 %v568, %v639
    %v643 = vtanh.pop %v642
    %s644 = scalar_lea.vmem %s1, 56
    %v645 = vld [vmem:[%s644] sm:$0xff]
    %647 = vset.pattern.permute.xlu0 0
    %648 = vperm.xlu0 %647, %v645
    %v649 = vpop.permute.xlu0 %648
    %v651 = vmul.f32 %v649, %v54
    %v652 = vadd.f32 %v651, %v61
    %v654 = vsel %vm64, %v643, 0
    %656 = vmatprep.subr.mxu0 0.0
    %657 = vmatpush1.msra.mxu0 %v37
    %658 = vmatprep.subr.mxu0 0.0
    %659 = vmatpush1.msra.mxu0 %v38
    %660 = vmatprep.subr.mxu0 0.0
    %661 = vmatpush1.msra.mxu0 %v39
    %662 = vmatprep.subr.mxu0 0.0
    %663 = vmatpush1.msra.mxu0 %v40
    %664 = vmatprep.subr.mxu0 0.0
    %665 = vmatpush1.msra.mxu0 0.0
    %666 = vmatprep.subr.mxu0 0.0
    %667 = vmatpush1.msra.mxu0 0.0
    %668 = vmatprep.subr.mxu0 0.0
    %669 = vmatpush1.msra.mxu0 0.0
    %670 = vmatprep.subr.mxu0 0.0
    %671 = vmatpush1.msra.mxu0 0.0
    %672 = vmatprep.subr.mxu0 0.0
    %673 = vmatpush1.msra.mxu0 0.0
    %674 = vmatprep.subr.mxu0 0.0
    %675 = vmatpush1.msra.mxu0 0.0
    %676 = vmatprep.subr.mxu0 0.0
    %677 = vmatpush1.msra.mxu0 0.0
    %678 = vmatprep.subr.mxu0 0.0
    %679 = vmatpush1.msra.mxu0 0.0
    %680 = vmatprep.subr.mxu0 0.0
    %681 = vmatpush1.msra.mxu0 0.0
    %682 = vmatprep.subr.mxu0 0.0
    %683 = vmatpush1.msra.mxu0 0.0
    %684 = vmatprep.subr.mxu0 0.0
    %685 = vmatpush1.msra.mxu0 0.0
    %686 = vmatprep.subr.mxu0 0.0
    %687 = vmatpush1.msra.mxu0 0.0
    %688 = vmatprep.subr.mxu0 0.0
    %689 = vmatpush1.msra.mxu0 0.0
    %690 = vmatprep.subr.mxu0 0.0
    %691 = vmatpush1.msra.mxu0 0.0
    %692 = vmatprep.subr.mxu0 0.0
    %693 = vmatpush1.msra.mxu0 0.0
    %694 = vmatprep.subr.mxu0 0.0
    %695 = vmatpush1.msra.mxu0 0.0
    %696 = vmatprep.subr.mxu0 0.0
    %697 = vmatpush1.msra.mxu0 0.0
    %698 = vmatprep.subr.mxu0 0.0
    %699 = vmatpush1.msra.mxu0 0.0
    %700 = vmatprep.subr.mxu0 0.0
    %701 = vmatpush1.msra.mxu0 0.0
    %702 = vmatprep.subr.mxu0 0.0
    %703 = vmatpush1.msra.mxu0 0.0
    %704 = vmatprep.subr.mxu0 0.0
    %705 = vmatpush1.msra.mxu0 0.0
    %706 = vmatprep.subr.mxu0 0.0
    %707 = vmatpush1.msra.mxu0 0.0
    %708 = vmatprep.subr.mxu0 0.0
    %709 = vmatpush1.msra.mxu0 0.0
    %710 = vmatprep.subr.mxu0 0.0
    %711 = vmatpush1.msra.mxu0 0.0
    %712 = vmatprep.subr.mxu0 0.0
    %713 = vmatpush1.msra.mxu0 0.0
    %714 = vmatprep.subr.mxu0 0.0
    %715 = vmatpush1.msra.mxu0 0.0
    %716 = vmatprep.subr.mxu0 0.0
    %717 = vmatpush1.msra.mxu0 0.0
    %718 = vmatprep.subr.mxu0 0.0
    %719 = vmatpush1.msra.mxu0 0.0
    %720 = vmatprep.mubr.f32.mxu0 0.0
    %721 = vmatmul.mubr.f32.gmra.mrb[0].mxu0 %v654
    %v722 = vpop.f32.mrb[0].mxu0
    %v723 = vadd.f32 0.0, %v722
    %v724 = vpop.f32.mrb[0].mxu0
    %725 = vdwg.mxu0
    %v726 = vadd.f32 %v652, %v723
    %v727 = vtanh.pop %v726
    %728 = vst.msk [vmem:[#allocation2] sm:$0xff] %vm64, %v727
    // Predicated region
    $region34: #{tpu_custom_call.1} parent=1 // pred_check
      %p729 = pneg %p30
    $region35: #{tpu_custom_call.1} parent=1 // pred_check_branch
      %731 = sbr.rel (%p729) target = $region37
    $region36: #{tpu_custom_call.1} parent=1 // pred_region
      %v732 = vld [vmem:[#allocation2] sm:$0xff]
      %733 = vst.msk [vmem:[#allocation5] sm:$0xff] %vm64, %v732
      %v734 = vld [vmem:[%s5] sm:$0xff]
      %v735 = vld [vmem:[%s5 + $0x8] sm:$0xff]
      %v736 = vld [vmem:[%s5 + $0x10] sm:$0xff]
      %v737 = vld [vmem:[%s5 + $0x18] sm:$0xff]
      %v738 = vld [vmem:[%s6] sm:$0x1]
      %v740 = vlaneseq
      %v741 = vshrl.u32 %v740, 7
      %v742 = vsub.s32 0, %v741
      %v743 = vrot.slane %v738, %v742
      %v746 = vsel %vm64, %v732, 0
      %748 = vmatprep.subr.mxu0 0.0
      %749 = vmatpush1.msra.mxu0 %v734
      %750 = vmatprep.subr.mxu0 0.0
      %751 = vmatpush1.msra.mxu0 %v735
      %752 = vmatprep.subr.mxu0 0.0
      %753 = vmatpush1.msra.mxu0 %v736
      %754 = vmatprep.subr.mxu0 0.0
      %755 = vmatpush1.msra.mxu0 %v737
      %756 = vmatprep.subr.mxu0 0.0
      %757 = vmatpush1.msra.mxu0 0.0
      %758 = vmatprep.subr.mxu0 0.0
      %759 = vmatpush1.msra.mxu0 0.0
      %760 = vmatprep.subr.mxu0 0.0
      %761 = vmatpush1.msra.mxu0 0.0
      %762 = vmatprep.subr.mxu0 0.0
      %763 = vmatpush1.msra.mxu0 0.0
      %764 = vmatprep.subr.mxu0 0.0
      %765 = vmatpush1.msra.mxu0 0.0
      %766 = vmatprep.subr.mxu0 0.0
      %767 = vmatpush1.msra.mxu0 0.0
      %768 = vmatprep.subr.mxu0 0.0
      %769 = vmatpush1.msra.mxu0 0.0
      %770 = vmatprep.subr.mxu0 0.0
      %771 = vmatpush1.msra.mxu0 0.0
      %772 = vmatprep.subr.mxu0 0.0
      %773 = vmatpush1.msra.mxu0 0.0
      %774 = vmatprep.subr.mxu0 0.0
      %775 = vmatpush1.msra.mxu0 0.0
      %776 = vmatprep.subr.mxu0 0.0
      %777 = vmatpush1.msra.mxu0 0.0
      %778 = vmatprep.subr.mxu0 0.0
      %779 = vmatpush1.msra.mxu0 0.0
      %780 = vmatprep.subr.mxu0 0.0
      %781 = vmatpush1.msra.mxu0 0.0
      %782 = vmatprep.subr.mxu0 0.0
      %783 = vmatpush1.msra.mxu0 0.0
      %784 = vmatprep.subr.mxu0 0.0
      %785 = vmatpush1.msra.mxu0 0.0
      %786 = vmatprep.subr.mxu0 0.0
      %787 = vmatpush1.msra.mxu0 0.0
      %788 = vmatprep.subr.mxu0 0.0
      %789 = vmatpush1.msra.mxu0 0.0
      %790 = vmatprep.subr.mxu0 0.0
      %791 = vmatpush1.msra.mxu0 0.0
      %792 = vmatprep.subr.mxu0 0.0
      %793 = vmatpush1.msra.mxu0 0.0
      %794 = vmatprep.subr.mxu0 0.0
      %795 = vmatpush1.msra.mxu0 0.0
      %796 = vmatprep.subr.mxu0 0.0
      %797 = vmatpush1.msra.mxu0 0.0
      %798 = vmatprep.subr.mxu0 0.0
      %799 = vmatpush1.msra.mxu0 0.0
      %800 = vmatprep.subr.mxu0 0.0
      %801 = vmatpush1.msra.mxu0 0.0
      %802 = vmatprep.subr.mxu0 0.0
      %803 = vmatpush1.msra.mxu0 0.0
      %804 = vmatprep.subr.mxu0 0.0
      %805 = vmatpush1.msra.mxu0 0.0
      %806 = vmatprep.subr.mxu0 0.0
      %807 = vmatpush1.msra.mxu0 0.0
      %808 = vmatprep.subr.mxu0 0.0
      %809 = vmatpush1.msra.mxu0 0.0
      %810 = vmatprep.subr.mxu0 0.0
      %811 = vmatpush1.msra.mxu0 0.0
      %812 = vmatprep.mubr.f32.mxu0 0.0
      %813 = vmatmul.mubr.f32.gmra.mrb[0].mxu0 %v746
      %v814 = vpop.f32.mrb[0].mxu0
      %v815 = vadd.f32 %v743, %v814
      %v816 = vpop.f32.mrb[0].mxu0
      %817 = vdwg.mxu0
      %818 = vst [vmem:[#allocation3] sm:$0xff] %v815
    $region37: #{tpu_custom_call.1} parent=1 // pred_fallthru
      _
    // Predicated region
    $region38: #{tpu_custom_call.1} parent=1 // pred_check
      _
    $region39: #{tpu_custom_call.1} parent=1 // pred_check_branch
      %820 = sbr.rel (0) target = $region41
    $region40: #{tpu_custom_call.1} parent=1 // pred_region
      %s822 = ssub.s32 128, 128
      %823 = vsyncadd [#allocation4], %s822
      %s825 = sshll.u32 [#allocation3], 4
      %s826 = int_to_ptr.vmem [resolvable:$true] %s825
      %828 = dma.vmem_to_hbm [thread:$0]  %s826, 128, %s7, [#allocation4]
    $region41: #{tpu_custom_call.1} parent=1 // pred_fallthru
      _
    // Predicated region
    $region42: #{tpu_custom_call.1} parent=1 // pred_check
      _
    $region43: #{tpu_custom_call.1} parent=1 // pred_check_branch
      %830 = sbr.rel (0) target = $region45
    $region44: #{tpu_custom_call.1} parent=1 // pred_region
      %s832 = ssub.s32 128, 128
      %833 = vsyncadd [#allocation6], %s832
      %s835 = sshll.u32 [#allocation5], 4
      %s836 = int_to_ptr.vmem [resolvable:$true] %s835
      %838 = dma.vmem_to_hbm [thread:$0]  %s836, 128, %s8, [#allocation6]
    $region45: #{tpu_custom_call.1} parent=1 // pred_fallthru
      _
    // Predicated region
    $region46: #{tpu_custom_call.1} parent=1 // pred_check
      _
    $region47: #{tpu_custom_call.1} parent=1 // pred_check_branch
      %840 = sbr.rel (0) target = $region49
    $region48: #{tpu_custom_call.1} parent=1 // pred_region
      %841 = dma.done [#allocation4], 128
    $region49: #{tpu_custom_call.1} parent=1 // pred_fallthru
      _
    // Predicated region
    $region50: #{tpu_custom_call.1} parent=1 // pred_check
      _
    $region51: #{tpu_custom_call.1} parent=1 // pred_check_branch
      %843 = sbr.rel (0) target = $region53
    $region52: #{tpu_custom_call.1} parent=1 // pred_region
      %844 = dma.done [#allocation6], 128
    $region53: #{tpu_custom_call.1} parent=1 // pred_fallthru
      _
    %845 = vsyncpa [#allocation4], 1
    %846 = vsyncpa [#allocation6], 1

</llo_original>
